<compile_context>
chip_gen: v5e
topology: v5e:2x2
jax: 0.10.0
libtpu: 0.0.40
codegen_flags: <defaults>
</compile_context>

<pallas_src>
import jax
import jax.numpy as jnp
from jax.experimental import pallas as pl
from jax.experimental.pallas import tpu as pltpu


_LANE = 128            # TPU vreg lane width (minor-dim granularity)
_MAX_BATCH_FOLD = 16   # cap on batches folded per grid step (bounds unroll)
_DEFAULT_TILE_BYTES = 4 << 20   # ~roofline plateau per measured tiled-memcpy data


def _round_down_128(n):
    return (n // _LANE) * _LANE


def _vmem_capacity_bytes():
    """Per-core VMEM capacity; conservative fallback if the query fails."""
    try:
        return int(pltpu.get_tpu_info().vmem_capacity_bytes)
    except Exception:
        return 64 << 20   # true for v7x, under-estimates v5e/v6e (safe)


def _vmem_limit(live_bytes, vmem_cap):
    # live double-buffered tiles + headroom for Mosaic transpose scratch,
    # clamped to 3/4 of the generation's physical per-core VMEM.
    return int(min(max(live_bytes + (8 << 20), 16 << 20), (vmem_cap * 3) // 4))


def _pick_tiles(S, D, itemsize, tile_bytes):
    """(ts, td) for the 2-D tiled path.

    ts tiles S and is the OUTPUT tile's minor (lane) axis -> stretch it first so
    output stores stay lane-dense/unmasked and HBM write runs are long.
    td tiles D and is the INPUT tile's minor axis; ~1 KiB rows are enough for
    read-side locality, so the rest of the byte budget goes to ts.
    Full-extent blocks are used whenever an axis fits (always legal); otherwise
    tiles are multiples of 128 (covers f32/bf16/int8 sublane x lane packing).
    """
    elem_budget = max(tile_bytes // itemsize, _LANE * _LANE)
    td_want = max(_LANE, 1024 // itemsize)          # 256 f32 / 512 bf16 / 1024 int8
    td = D if D <= td_want else td_want
    ts_max = max(_LANE, _round_down_128(elem_budget // max(td, 1)))
    ts = S if S <= ts_max else ts_max
    return ts, td


def _transpose_tile_kernel(x_ref, o_ref):
    # x_ref: (ts, td) tile; o_ref: (td, ts) tile (batch dim squeezed by the
    # BlockSpec).  Pure 2-D transpose -> XLU vxpose, hidden under the DMA.
    o_ref[...] = x_ref[...].T


def _make_batched_kernel(tb):
    def kernel(x_ref, o_ref):
        # x_ref: (tb, S, D); o_ref: (tb, D, S).  tb is a static Python int, so
        # this unrolls into tb independent 2-D transposes of the minor dims.
        for t in range(tb):
            o_ref[t] = x_ref[t].T
    return kernel


def swap_axes_1_2(x, *, tile_bytes=None, force_pallas=False):
    """Pallas equivalent of torch.Tensor.transpose(1, 2) for a 3-D input."""
    assert x.ndim == 3, "this kernel implements SwapAxes(dim1=1, dim2=2) on 3-D input"
    B, S, D = x.shape
    itemsize = x.dtype.itemsize
    vmem_cap = _vmem_capacity_bytes()

    if tile_bytes is None:
        tile_bytes = min(_DEFAULT_TILE_BYTES, vmem_cap // 12)
    tile_bytes = max(int(tile_bytes), _LANE * _LANE * itemsize)

    # Lane-sparse output (S < 128) forces masked vst.msk partial stores and
    # short HBM write rows; XLA's native transpose wins there.  Keep a
    # force_pallas escape hatch so the kernel path can still be exercised.
    if (S < _LANE or D < _LANE) and not force_pallas:
        return jnp.swapaxes(x, 1, 2)

    out_shape = jax.ShapeDtypeStruct((B, D, S), x.dtype)
    cost = pl.CostEstimate(flops=0, transcendentals=0,
                           bytes_accessed=int(2 * B * S * D * itemsize))

    per_batch_bytes = S * D * itemsize
    if per_batch_bytes <= tile_bytes:
        # ---- Batch-folded path: full (S, D) slabs, several batches per step.
        tb = max(1, min(B, tile_bytes // per_batch_bytes, _MAX_BATCH_FOLD))
        live = 4 * tb * per_batch_bytes           # in + out, double-buffered
        return pl.pallas_call(
            _make_batched_kernel(tb),
            out_shape=out_shape,
            grid=(pl.cdiv(B, tb),),
            in_specs=[pl.BlockSpec((tb, S, D), lambda b: (b, 0, 0))],
            out_specs=pl.BlockSpec((tb, D, S), lambda b: (b, 0, 0)),
            compiler_params=pltpu.CompilerParams(
                dimension_semantics=("parallel",),
                vmem_limit_bytes=_vmem_limit(live, vmem_cap)),
            cost_estimate=cost,
        )(x)

    # ---- 2-D tiled path: (ts, td) -> (td, ts) tiles, batch dim squeezed.
    ts, td = _pick_tiles(S, D, itemsize, tile_bytes)
    live = 4 * ts * td * itemsize                 # in + out, double-buffered
    # Inner-most grid axis walks S-tiles: consecutive steps advance the
    # OUTPUT's minor-axis block, so HBM writeback is sequential.
    grid = (B, pl.cdiv(D, td), pl.cdiv(S, ts))
    return pl.pallas_call(
        _transpose_tile_kernel,
        out_shape=out_shape,
        grid=grid,
        in_specs=[pl.BlockSpec((pl.Squeezed(), ts, td), lambda b, j, i: (b, i, j))],
        out_specs=pl.BlockSpec((pl.Squeezed(), td, ts), lambda b, j, i: (b, j, i)),
        compiler_params=pltpu.CompilerParams(
            dimension_semantics=("parallel", "parallel", "parallel"),
            vmem_limit_bytes=_vmem_limit(live, vmem_cap)),
        cost_estimate=cost,
    )(x)


def swap_axes(x, dim1=1, dim2=2, **kwargs):
    """Module-level forward: x.transpose(dim1, dim2)."""
    d1 = dim1 % x.ndim
    d2 = dim2 % x.ndim
    if x.ndim == 3 and {d1, d2} == {1, 2}:
        return swap_axes_1_2(x, **kwargs)
    # TODO(synk): only the module's default (dim1=1, dim2=2) on 3-D input is
    # kernelized; other axis pairs use XLA's native transpose.
    return jnp.swapaxes(x, d1, d2)


if __name__ == "__main__":
    key = jax.random.PRNGKey(0)
    k1, k2, k3, k4 = jax.random.split(key, 4)

    # 1) Module-spec small shape (batch=2, seq=8, hidden=32).  Lane-sparse
    #    (S, D < 128) -> wrapper falls back to XLA's transpose.
    B, S, D = 2, 8, 32
    x = jax.random.normal(k1, (B, S, D), dtype=jnp.float32)
    y = swap_axes(x)
    jax.block_until_ready(y)
    assert y.shape == (B, D, S), y.shape
    assert jnp.array_equal(y, jnp.swapaxes(x, 1, 2)), "mismatch (fallback path)"

    # 2) Same small shape forced through the Pallas batch-folded kernel.
    y_p = swap_axes_1_2(x, force_pallas=True)
    jax.block_until_ready(y_p)
    assert jnp.array_equal(y_p, jnp.swapaxes(x, 1, 2)), "mismatch (forced fold path)"

    # 3) Batch-folded path, lane-dense, fold factor 2 with a partial last
    #    batch block (B=5 not divisible by 2).
    x3 = jax.random.normal(k2, (5, 200, 384), dtype=jnp.float32)
    y3 = swap_axes_1_2(x3, tile_bytes=700_000)
    jax.block_until_ready(y3)
    assert y3.shape == (5, 384, 200), y3.shape
    assert jnp.array_equal(y3, jnp.swapaxes(x3, 1, 2)), "mismatch (fold path)"

    # 4) 2-D tiled path with ragged edges on BOTH S and D (small tile budget
    #    forces a multi-block grid: ts=128, td=256).
    x4 = jax.random.normal(k3, (2, 328, 520), dtype=jnp.float32)
    y4 = swap_axes_1_2(x4, tile_bytes=128 * 128 * 4)
    jax.block_until_ready(y4)
    assert y4.shape == (2, 520, 328), y4.shape
    assert jnp.array_equal(y4, jnp.swapaxes(x4, 1, 2)), "mismatch (tiled path)"

    # 5) bf16 tiled path (dtype-aware tile selection: td=512 for 1 KiB rows).
    x5 = jax.random.normal(k4, (2, 384, 640), dtype=jnp.bfloat16)
    y5 = swap_axes_1_2(x5, tile_bytes=64 * 1024)
    jax.block_until_ready(y5)
    assert y5.shape == (2, 640, 384), y5.shape
    assert jnp.array_equal(y5, jnp.swapaxes(x5, 1, 2)), "mismatch (bf16 tiled path)"

    print("KERNEL_OK")
</pallas_src>

<mosaic_0001>
module attributes {stable_mosaic.version = 11 : i64} {
  func.func @kernel(%arg0: i32, %arg1: memref<2x8x32xf32, #tpu.memory_space<vmem>>, %arg2: memref<2x32x8xf32, #tpu.memory_space<vmem>>) attributes {dimension_semantics = [#tpu.dimension_semantics<parallel>], iteration_bounds = array<i64: 1>, scalar_prefetch = 0 : i64, scratch_operands = 0 : i64, tpu.core_type = #tpu.core_type<tc>, window_params = [{transform_indices = @transform_0, window_bounds = array<i64: 2, 8, 32>}, {transform_indices = @transform_1, window_bounds = array<i64: 2, 32, 8>}]} {
    %c0 = arith.constant 0 : index
    %c0_0 = arith.constant 0 : index
    %c0_1 = arith.constant 0 : index
    %0 = vector.load %arg1[%c0, %c0_0, %c0_1] : memref<2x8x32xf32, #tpu.memory_space<vmem>>, vector<1x8x32xf32>
    %1 = vector.shape_cast %0 : vector<1x8x32xf32> to vector<8x32xf32>
    %2 = tpu.transpose %1, [1, 0] : vector<8x32xf32> -> vector<32x8xf32>
    %c0_2 = arith.constant 0 : index
    %c0_3 = arith.constant 0 : index
    %c0_4 = arith.constant 0 : index
    %3 = vector.load %arg2[%c0_2, %c0_3, %c0_4] : memref<2x32x8xf32, #tpu.memory_space<vmem>>, vector<1x32x8xf32>
    %4 = vector.shape_cast %3 : vector<1x32x8xf32> to vector<32x8xf32>
    %5 = vector.shape_cast %2 : vector<32x8xf32> to vector<1x32x8xf32>
    tpu.vector_store %arg2[%c0_2, %c0_3, %c0_4], %5 {strides = array<i32>} : memref<2x32x8xf32, #tpu.memory_space<vmem>>, vector<1x32x8xf32>,
    %c1 = arith.constant 1 : index
    %c0_5 = arith.constant 0 : index
    %c0_6 = arith.constant 0 : index
    %6 = vector.load %arg1[%c1, %c0_5, %c0_6] : memref<2x8x32xf32, #tpu.memory_space<vmem>>, vector<1x8x32xf32>
    %7 = vector.shape_cast %6 : vector<1x8x32xf32> to vector<8x32xf32>
    %8 = tpu.transpose %7, [1, 0] : vector<8x32xf32> -> vector<32x8xf32>
    %c1_7 = arith.constant 1 : index
    %c0_8 = arith.constant 0 : index
    %c0_9 = arith.constant 0 : index
    %9 = vector.load %arg2[%c1_7, %c0_8, %c0_9] : memref<2x32x8xf32, #tpu.memory_space<vmem>>, vector<1x32x8xf32>
    %10 = vector.shape_cast %9 : vector<1x32x8xf32> to vector<32x8xf32>
    %11 = vector.shape_cast %8 : vector<32x8xf32> to vector<1x32x8xf32>
    tpu.vector_store %arg2[%c1_7, %c0_8, %c0_9], %11 {strides = array<i32>} : memref<2x32x8xf32, #tpu.memory_space<vmem>>, vector<1x32x8xf32>,
    return
  }
  func.func @transform_0(%arg0: i32) -> (i32, i32, i32) {
    %c0_i32 = arith.constant 0 : i32
    %c0_i32_0 = arith.constant 0 : i32
    %c0_i32_1 = arith.constant 0 : i32
    return %arg0, %c0_i32, %c0_i32_0 : i32, i32, i32
  }
  func.func @transform_1(%arg0: i32) -> (i32, i32, i32) {
    %c0_i32 = arith.constant 0 : i32
    %c0_i32_0 = arith.constant 0 : i32
    %c0_i32_1 = arith.constant 0 : i32
    return %arg0, %c0_i32, %c0_i32_0 : i32, i32, i32
  }
}

</mosaic_0001>

<llo_original>
// kernel: tpu_custom_call.1
$region0: #{tpu_custom_call.1}
  #allocation0 [shape = 'u32[]', space=smem, size = 0x4, offset = 0x4, fixed_abs, tag = 'smem constant byte address 0x4 - core index']
  #allocation1 [shape = 'u32[72,128]{1,0:T(1,128)}', space=vmem, size = 0x9000, scoped, tag = 'internal scratch']
  %s0 = inlined_call_operand.hbm [shape: f32[2,8,32], index: 0, kind: input, shape index: {}]
  %s1 = inlined_call_operand.vmem [shape: f32[2,32,8], index: 1, kind: output, shape index: {}]
  %s2 = sld [smem:[#allocation0]]
  $region18: #{tpu_custom_call.1} parent=0
    _
  %s4 = ssub.s32 1, %s2
  %s5 = scalar_select 0, %s4, %s2
  $region1: #{tpu_custom_call.1} parent=0
    #allocation2 [shape = 'u8[8192]{0}', space=vmem, size = 0x2000, scoped, tag = 'input window, operand 0, single buffered']
    #allocation3 [shape = 's32[1]{0}', space=sflag, size = 0x4, scoped, tag = 'scoped memory for tpu_custom_call.1']
    %6 = vsyncpa [#allocation3], 0
    // Predicated region
    $region2: #{tpu_custom_call.1} parent=1 // pred_check
      _
    $region3: #{tpu_custom_call.1} parent=1 // pred_check_branch
      %8 = sbr.rel (0) target = $region5
    $region4: #{tpu_custom_call.1} parent=1 // pred_region
      %10 = vsyncadd [#allocation3], 0
      %s11 = sshll.u32 %s0, 4
      %s12 = int_to_ptr.hbm [resolvable:$true] %s11
      %s13 = sshll.u32 [#allocation2], 4
      %s14 = int_to_ptr.vmem [resolvable:$true] %s13
      %19 = dma.hbm_to_vmem [thread:$0]  %s12, 256, %s14, [#allocation3], 128, 128, 8
    $region5: #{tpu_custom_call.1} parent=1 // pred_fallthru
      _
    // Predicated region
    $region6: #{tpu_custom_call.1} parent=1 // pred_check
      _
    $region7: #{tpu_custom_call.1} parent=1 // pred_check_branch
      %21 = sbr.rel (0) target = $region9
    $region8: #{tpu_custom_call.1} parent=1 // pred_region
      %23 = dma.done [#allocation3], 256
    $region9: #{tpu_custom_call.1} parent=1 // pred_fallthru
      _
    %v24 = vld [vmem:[#allocation2] sm:$0xff]
    %25 = vxpose.xlu0.b32.start [1/16] %v24, 128
    %26 = vxpose.xlu0.b32.cont [2/16] 0.0, 128
    %27 = vxpose.xlu0.b32.cont [3/16] 0.0, 128
    %28 = vxpose.xlu0.b32.cont [4/16] 0.0, 128
    %29 = vxpose.xlu0.b32.cont [5/16] 0.0, 128
    %30 = vxpose.xlu0.b32.cont [6/16] 0.0, 128
    %31 = vxpose.xlu0.b32.cont [7/16] 0.0, 128
    %32 = vxpose.xlu0.b32.cont [8/16] 0.0, 128
    %33 = vxpose.xlu0.b32.cont [9/16] 0.0, 128
    %34 = vxpose.xlu0.b32.cont [10/16] 0.0, 128
    %35 = vxpose.xlu0.b32.cont [11/16] 0.0, 128
    %36 = vxpose.xlu0.b32.cont [12/16] 0.0, 128
    %37 = vxpose.xlu0.b32.cont [13/16] 0.0, 128
    %38 = vxpose.xlu0.b32.cont [14/16] 0.0, 128
    %39 = vxpose.xlu0.b32.cont [15/16] 0.0, 128
    %40 = vxpose.xlu0.b32.end [16/16] 0.0, 128
    %v41 = vpop.trf.xlu0
    %v42 = vpop.trf.xlu0
    %v43 = vpop.trf.xlu0
    %v44 = vpop.trf.xlu0
    %v45 = vpop.trf.xlu0
    %v46 = vpop.trf.xlu0
    %v47 = vpop.trf.xlu0
    %v48 = vpop.trf.xlu0
    %v49 = vpop.trf.xlu0
    %v50 = vpop.trf.xlu0
    %v51 = vpop.trf.xlu0
    %v52 = vpop.trf.xlu0
    %v53 = vpop.trf.xlu0
    %v54 = vpop.trf.xlu0
    %v55 = vpop.trf.xlu0
    %v56 = vpop.trf.xlu0
    %vm57 = vcmask 64512
    %58 = vst.msk [vmem:[%s1] sm:$0xff] %vm57, %v41
    %59 = vst.msk [vmem:[%s1 + $0x8] sm:$0xff] %vm57, %v42
    %60 = vst.msk [vmem:[%s1 + $0x10] sm:$0xff] %vm57, %v43
    %61 = vst.msk [vmem:[%s1 + $0x18] sm:$0xff] %vm57, %v44
    %s62 = scalar_lea.vmem [#allocation2], 8
    %v63 = vld [vmem:[%s62] sm:$0xff]
    %64 = vxpose.xlu0.b32.start [1/16] %v63, 128
    %65 = vxpose.xlu0.b32.cont [2/16] 0.0, 128
    %66 = vxpose.xlu0.b32.cont [3/16] 0.0, 128
    %67 = vxpose.xlu0.b32.cont [4/16] 0.0, 128
    %68 = vxpose.xlu0.b32.cont [5/16] 0.0, 128
    %69 = vxpose.xlu0.b32.cont [6/16] 0.0, 128
    %70 = vxpose.xlu0.b32.cont [7/16] 0.0, 128
    %71 = vxpose.xlu0.b32.cont [8/16] 0.0, 128
    %72 = vxpose.xlu0.b32.cont [9/16] 0.0, 128
    %73 = vxpose.xlu0.b32.cont [10/16] 0.0, 128
    %74 = vxpose.xlu0.b32.cont [11/16] 0.0, 128
    %75 = vxpose.xlu0.b32.cont [12/16] 0.0, 128
    %76 = vxpose.xlu0.b32.cont [13/16] 0.0, 128
    %77 = vxpose.xlu0.b32.cont [14/16] 0.0, 128
    %78 = vxpose.xlu0.b32.cont [15/16] 0.0, 128
    %79 = vxpose.xlu0.b32.end [16/16] 0.0, 128
    %v80 = vpop.trf.xlu0
    %v81 = vpop.trf.xlu0
    %v82 = vpop.trf.xlu0
    %v83 = vpop.trf.xlu0
    %v84 = vpop.trf.xlu0
    %v85 = vpop.trf.xlu0
    %v86 = vpop.trf.xlu0
    %v87 = vpop.trf.xlu0
    %v88 = vpop.trf.xlu0
    %v89 = vpop.trf.xlu0
    %v90 = vpop.trf.xlu0
    %v91 = vpop.trf.xlu0
    %v92 = vpop.trf.xlu0
    %v93 = vpop.trf.xlu0
    %v94 = vpop.trf.xlu0
    %v95 = vpop.trf.xlu0
    %s96 = scalar_lea.vmem %s1, 32
    %97 = vst.msk [vmem:[%s96] sm:$0xff] %vm57, %v80
    %98 = vst.msk [vmem:[%s96 + $0x8] sm:$0xff] %vm57, %v81
    %99 = vst.msk [vmem:[%s96 + $0x10] sm:$0xff] %vm57, %v82
    %100 = vst.msk [vmem:[%s96 + $0x18] sm:$0xff] %vm57, %v83
    // Predicated region
    $region10: #{tpu_custom_call.1} parent=1 // pred_check
      _
    $region11: #{tpu_custom_call.1} parent=1 // pred_check_branch
      %102 = sbr.rel (0) target = $region13
    $region12: #{tpu_custom_call.1} parent=1 // pred_region
      _
    $region13: #{tpu_custom_call.1} parent=1 // pred_fallthru
      _
    // Predicated region
    $region14: #{tpu_custom_call.1} parent=1 // pred_check
      _
    $region15: #{tpu_custom_call.1} parent=1 // pred_check_branch
      %104 = sbr.rel (0) target = $region17
    $region16: #{tpu_custom_call.1} parent=1 // pred_region
      _
    $region17: #{tpu_custom_call.1} parent=1 // pred_fallthru
      _
    %105 = vsyncpa [#allocation3], 1

</llo_original>
